<compile_context>
chip_gen: v5e
topology: v5e:2x2
jax: 0.10.0
libtpu: 0.0.40
codegen_flags: <defaults>
</compile_context>

<pallas_src>
import jax
import jax.numpy as jnp
from jax.experimental import pallas as pl
from jax.experimental.pallas import tpu as pltpu


def _default_num_chunks():
    """2 chunks (one per TensorCore) on v7x, 1 on single-TC chips (v5e/v6e)."""
    try:
        kind = jax.devices()[0].device_kind.lower()
    except Exception:
        return 1
    return 2 if "v7" in kind else 1


def _make_kernel(B, tb, steps, acc_rows):
    def kernel(x_ref, t_ref, o_ref, acc_ref):
        """Grid (num_chunks, steps): chunk axis 'parallel' (megacore), step
        axis is the batch-tile reduction ('arbitrary').

        x_ref   : (tb, D)  native dtype  input tile
        t_ref   : (tb, D)  native dtype  target tile
        o_ref   : (1, acc_rows, D) f32   per-chunk partial sums (lane dense)
        acc_ref : (acc_rows, D)    f32   VMEM scratch accumulator
        """
        c = pl.program_id(0)
        i = pl.program_id(1)

        @pl.when(i == 0)
        def _():
            acc_ref[...] = jnp.zeros_like(acc_ref)

        # Upcast in-kernel (inputs may be bf16 in HBM); mask is applied to the
        # tiny partials after the kernel, so only one subtract here.
        d = x_ref[...].astype(jnp.float32) - t_ref[...].astype(jnp.float32)

        # Zero contributions from rows past the true batch end (ragged tail,
        # or a clamped duplicate block) instead of padding HBM copies.
        row0 = (c * steps + i) * tb
        rows = row0 + jax.lax.broadcasted_iota(jnp.int32, (tb, 1), 0)
        d = jnp.where(rows < B, d, 0.0)

        sq = d * d
        # Reduce batch rows down to acc_rows sublanes: pure vreg adds, no
        # cross-lane work; acc_rows=32 gives 4 independent accumulation chains.
        acc_ref[...] += jnp.sum(sq.reshape(tb // acc_rows, acc_rows, -1), axis=0)

        @pl.when(i == pl.num_programs(1) - 1)
        def _():
            o_ref[0, :, :] = acc_ref[...]

    return kernel


def masked_mse_loss(x, t, mask, *, tile_b=2048, num_chunks=None):
    """MaskedLoss(nn.MSELoss(), ...) forward: mean((x*mask - t*mask)**2)."""
    B, D = x.shape
    assert t.shape == (B, D)
    if num_chunks is None:
        num_chunks = _default_num_chunks()

    # Tile size: as large as possible up to tile_b (amortizes ~0.35us/step grid
    # overhead), a multiple of 32 rows (covers bf16 sublane packing and the
    # 4-chain accumulator), and never larger than B so edge blocks stay the
    # standard partial-block case.
    if B >= 32:
        tb = min(tile_b, (B // 32) * 32)
        acc_rows = 32
    else:
        tb = B                      # single block equal to the full array dim
        acc_rows = B

    total_steps = pl.cdiv(B, tb)
    num_chunks = max(1, min(num_chunks, total_steps))
    steps = pl.cdiv(total_steps, num_chunks)
    last_block = total_steps - 1

    # Clamp so a chunk's trailing (duplicate) block never starts fully out of
    # bounds; its rows are all >= B so the in-kernel row mask zeroes it.
    def in_map(c, i):
        return (jnp.minimum(c * steps + i, last_block), 0)

    bytes_accessed = B * D * (x.dtype.itemsize + t.dtype.itemsize)
    cost = pl.CostEstimate(flops=3 * B * D, transcendentals=0,
                           bytes_accessed=bytes_accessed)

    kernel = _make_kernel(B, tb, steps, acc_rows)

    partials = pl.pallas_call(
        kernel,
        out_shape=jax.ShapeDtypeStruct((num_chunks, acc_rows, D), jnp.float32),
        grid_spec=pltpu.PrefetchScalarGridSpec(
            num_scalar_prefetch=0,
            grid=(num_chunks, steps),
            in_specs=[
                pl.BlockSpec((tb, D), in_map),   # input  (native dtype)
                pl.BlockSpec((tb, D), in_map),   # target (native dtype)
            ],
            out_specs=pl.BlockSpec((1, acc_rows, D), lambda c, i: (c, 0, 0)),
            scratch_shapes=[pltpu.VMEM((acc_rows, D), jnp.float32)],
        ),
        compiler_params=pltpu.CompilerParams(
            dimension_semantics=("parallel", "arbitrary"),
        ),
        cost_estimate=cost,
    )(x, t)

    # Tiny final collapse: column sums * mask**2 (exact even for non-binary
    # masks), then mean over ALL B*D elements — matching
    # nn.MSELoss()(input * mask, target * mask).
    col_sums = jnp.sum(partials, axis=(0, 1))                    # (D,)
    m = mask.reshape(-1).astype(jnp.float32)
    return jnp.sum(col_sums * (m * m)) / jnp.float32(B * D)


def make_mask(input_size, unused_cols):
    """Replicates MaskedLoss.__init__: ones(input_size); mask[unused]=0; view(1,-1)."""
    mask = jnp.ones((input_size,), dtype=jnp.float32)
    unused = jnp.array(sorted(unused_cols), dtype=jnp.int32)
    mask = mask.at[unused].set(0.0)
    return mask.reshape(1, -1)


def _ref_loss(x, t, mask):
    x = x.astype(jnp.float32)
    t = t.astype(jnp.float32)
    m = jnp.broadcast_to(mask.reshape(1, -1), x.shape)
    return jnp.mean((x * m - t * m) ** 2)


if __name__ == "__main__":
    D = 128
    unused_cols = [0, 3, 7, 42, 127]
    mask = make_mask(D, unused_cols)
    key = jax.random.PRNGKey(0)

    # Ragged f32 batch: exercises the in-kernel row masking (no HBM padding).
    B1 = 48
    k1, k2, key = jax.random.split(key, 3)
    x1 = jax.random.normal(k1, (B1, D), dtype=jnp.float32)
    t1 = jax.random.normal(k2, (B1, D), dtype=jnp.float32)
    loss1 = jax.block_until_ready(masked_mse_loss(x1, t1, mask))
    ref1 = _ref_loss(x1, t1, mask)
    assert jnp.allclose(loss1, ref1, rtol=1e-5, atol=1e-6), (loss1, ref1)

    # bf16 inputs: exercises the in-kernel upcast path (no wrapper astype).
    B2 = 64
    k3, k4 = jax.random.split(key)
    x2 = jax.random.normal(k3, (B2, D), dtype=jnp.float32).astype(jnp.bfloat16)
    t2 = jax.random.normal(k4, (B2, D), dtype=jnp.float32).astype(jnp.bfloat16)
    loss2 = jax.block_until_ready(masked_mse_loss(x2, t2, mask))
    ref2 = _ref_loss(x2, t2, mask)
    assert jnp.allclose(loss2, ref2, rtol=2e-5, atol=1e-6), (loss2, ref2)

    print("KERNEL_OK")
</pallas_src>

<mosaic_0001>
module attributes {stable_mosaic.version = 11 : i64} {
  func.func @kernel(%arg0: i32, %arg1: i32, %arg2: memref<32x128xf32, #tpu.memory_space<vmem>>, %arg3: memref<32x128xf32, #tpu.memory_space<vmem>>, %arg4: memref<1x32x128xf32, #tpu.memory_space<vmem>>, %arg5: memref<32x128xf32, #tpu.memory_space<vmem>>) attributes {dimension_semantics = [#tpu.dimension_semantics<parallel>, #tpu.dimension_semantics<arbitrary>], iteration_bounds = array<i64: 1, 2>, scalar_prefetch = 0 : i64, scratch_operands = 1 : i64, tpu.core_type = #tpu.core_type<tc>, window_params = [{transform_indices = @transform_0, window_bounds = array<i64: 32, 128>}, {transform_indices = @transform_1, window_bounds = array<i64: 32, 128>}, {transform_indices = @transform_2, window_bounds = array<i64: 1, 32, 128>}]} {
    %c0_i32 = arith.constant 0 : i32
    %0 = arith.cmpi eq, %arg1, %c0_i32 : i32
    %1 = arith.extui %0 : i1 to i32
    %c0_i32_0 = arith.constant 0 : i32
    %2 = arith.cmpi ne, %1, %c0_i32_0 : i32
    scf.if %2 {
      %cst_10 = arith.constant 0.000000e+00 : f32
      %27 = vector.broadcast %cst_10 : f32 to vector<32x128xf32>
      %c0_11 = arith.constant 0 : index
      %c0_12 = arith.constant 0 : index
      %28 = vector.load %arg5[%c0_11, %c0_12] : memref<32x128xf32, #tpu.memory_space<vmem>>, vector<32x128xf32>
      tpu.vector_store %arg5[%c0_11, %c0_12], %27 {strides = array<i32>} : memref<32x128xf32, #tpu.memory_space<vmem>>, vector<32x128xf32>,
    } else {
    }
    %c0 = arith.constant 0 : index
    %c0_1 = arith.constant 0 : index
    %3 = vector.load %arg2[%c0, %c0_1] : memref<32x128xf32, #tpu.memory_space<vmem>>, vector<32x128xf32>
    %c0_2 = arith.constant 0 : index
    %c0_3 = arith.constant 0 : index
    %4 = vector.load %arg3[%c0_2, %c0_3] : memref<32x128xf32, #tpu.memory_space<vmem>>, vector<32x128xf32>
    %5 = arith.subf %3, %4 : vector<32x128xf32>
    %c2_i32 = arith.constant 2 : i32
    %6 = arith.muli %arg0, %c2_i32 : i32
    %7 = arith.addi %6, %arg1 : i32
    %c32_i32 = arith.constant 32 : i32
    %8 = arith.muli %7, %c32_i32 : i32
    %9 = tpu.iota {dimensions = array<i32: 0>} : vector<32x1xi32>
    %10 = vector.broadcast %8 : i32 to vector<32x1xi32>
    %11 = arith.addi %10, %9 : vector<32x1xi32>
    %c48_i32 = arith.constant 48 : i32
    %12 = vector.broadcast %c48_i32 : i32 to vector<32x1xi32>
    %13 = arith.cmpi slt, %11, %12 : vector<32x1xi32>
    %cst = arith.constant 0.000000e+00 : f32
    %14 = vector.shape_cast %13 : vector<32x1xi1> to vector<32x1xi1>
    %15 = vector.broadcast %14 : vector<32x1xi1> to vector<32x128xi1>
    %16 = vector.broadcast %cst : f32 to vector<32x128xf32>
    %17 = arith.select %15, %5, %16 : vector<32x128xi1>, vector<32x128xf32>
    %18 = arith.mulf %17, %17 : vector<32x128xf32>
    %c0_4 = arith.constant 0 : index
    %c0_5 = arith.constant 0 : index
    %19 = vector.load %arg5[%c0_4, %c0_5] : memref<32x128xf32, #tpu.memory_space<vmem>>, vector<32x128xf32>
    %20 = vector.shape_cast %18 : vector<32x128xf32> to vector<1x32x128xf32>
    %cst_6 = arith.constant dense<0.000000e+00> : vector<32x128xf32>
    %21 = vector.multi_reduction <add>, %20, %cst_6 [0] : vector<1x32x128xf32> to vector<32x128xf32>
    %22 = arith.addf %19, %21 : vector<32x128xf32>
    %c0_7 = arith.constant 0 : index
    %c0_8 = arith.constant 0 : index
    %23 = vector.load %arg5[%c0_7, %c0_8] : memref<32x128xf32, #tpu.memory_space<vmem>>, vector<32x128xf32>
    tpu.vector_store %arg5[%c0_7, %c0_8], %22 {strides = array<i32>} : memref<32x128xf32, #tpu.memory_space<vmem>>, vector<32x128xf32>,
    %c1_i32 = arith.constant 1 : i32
    %24 = arith.cmpi eq, %arg1, %c1_i32 : i32
    %25 = arith.extui %24 : i1 to i32
    %c0_i32_9 = arith.constant 0 : i32
    %26 = arith.cmpi ne, %25, %c0_i32_9 : i32
    scf.if %26 {
      %c0_10 = arith.constant 0 : index
      %c0_11 = arith.constant 0 : index
      %27 = vector.load %arg5[%c0_10, %c0_11] : memref<32x128xf32, #tpu.memory_space<vmem>>, vector<32x128xf32>
      %c0_12 = arith.constant 0 : index
      %c0_13 = arith.constant 0 : index
      %c0_14 = arith.constant 0 : index
      %28 = vector.load %arg4[%c0_12, %c0_13, %c0_14] : memref<1x32x128xf32, #tpu.memory_space<vmem>>, vector<1x32x128xf32>
      %29 = vector.shape_cast %28 : vector<1x32x128xf32> to vector<32x128xf32>
      %30 = vector.shape_cast %27 : vector<32x128xf32> to vector<1x32x128xf32>
      tpu.vector_store %arg4[%c0_12, %c0_13, %c0_14], %30 {strides = array<i32>} : memref<1x32x128xf32, #tpu.memory_space<vmem>>, vector<1x32x128xf32>,
    } else {
    }
    return
  }
  func.func @transform_0(%arg0: i32, %arg1: i32) -> (i32, i32) {
    %c2_i32 = arith.constant 2 : i32
    %0 = arith.muli %arg0, %c2_i32 : i32
    %1 = arith.addi %0, %arg1 : i32
    %c1_i32 = arith.constant 1 : i32
    %2 = arith.minsi %1, %c1_i32 : i32
    %c0_i32 = arith.constant 0 : i32
    %c0_i32_0 = arith.constant 0 : i32
    return %2, %c0_i32 : i32, i32
  }
  func.func @transform_1(%arg0: i32, %arg1: i32) -> (i32, i32) {
    %c2_i32 = arith.constant 2 : i32
    %0 = arith.muli %arg0, %c2_i32 : i32
    %1 = arith.addi %0, %arg1 : i32
    %c1_i32 = arith.constant 1 : i32
    %2 = arith.minsi %1, %c1_i32 : i32
    %c0_i32 = arith.constant 0 : i32
    %c0_i32_0 = arith.constant 0 : i32
    return %2, %c0_i32 : i32, i32
  }
  func.func @transform_2(%arg0: i32, %arg1: i32) -> (i32, i32, i32) {
    %c0_i32 = arith.constant 0 : i32
    %c0_i32_0 = arith.constant 0 : i32
    %c0_i32_1 = arith.constant 0 : i32
    return %arg0, %c0_i32, %c0_i32_0 : i32, i32, i32
  }
}

</mosaic_0001>

<llo_original>
// kernel: tpu_custom_call.1
$region0: #{tpu_custom_call.1}
  #allocation0 [shape = 'u32[]', space=smem, size = 0x4, offset = 0x4, fixed_abs, tag = 'smem constant byte address 0x4 - core index']
  #allocation1 [shape = 'u32[72,128]{1,0:T(1,128)}', space=vmem, size = 0x9000, scoped, tag = 'internal scratch']
  #allocation2 [shape = 'f32[32,128]{1,0:T(8,128)}', space=vmem, size = 0x4000, scoped, tag = 'scratch operand']
  %s0 = inlined_call_operand.hbm [shape: f32[48,128], index: 0, kind: input, shape index: {}]
  %s1 = inlined_call_operand.hbm [shape: f32[48,128], index: 1, kind: input, shape index: {}]
  %s2 = inlined_call_operand.hbm [shape: f32[1,32,128], index: 2, kind: output, shape index: {}]
  %s3 = sld [smem:[#allocation0]]
  $region57: #{tpu_custom_call.1} parent=0
    _
  %s5 = ssub.s32 1, %s3
  %s6 = scalar_select 0, %s5, %s3
  $region1: #{tpu_custom_call.1} parent=0
    #allocation3 [shape = 'u8[32768]{0}', space=vmem, size = 0x8000, scoped, tag = 'input window, operand 0']
    #allocation4 [shape = 's32[2]{0}', space=sflag, size = 0x8, scoped, tag = 'scoped memory for tpu_custom_call.1']
    #allocation5 [shape = 's32[2]{0}', space=sflag, size = 0x8, scoped, tag = 'scoped memory for tpu_custom_call.1']
    #allocation6 [shape = 'u8[32768]{0}', space=vmem, size = 0x8000, scoped, tag = 'input window, operand 1']
    #allocation7 [shape = 's32[2]{0}', space=sflag, size = 0x8, scoped, tag = 'scoped memory for tpu_custom_call.1']
    #allocation8 [shape = 'u8[16384]{0}', space=vmem, size = 0x4000, scoped, tag = 'output window, operand 0, single buffered']
    %7 = vsyncpa [#allocation4], 0
    %s8 = scalar_lea.sflag [#allocation4], 1
    %9 = vsyncpa %s8, 0
    %10 = vsyncpa [#allocation7], 0
    %s11 = scalar_lea.sflag [#allocation7], 1
    %12 = vsyncpa %s11, 0
    %13 = vsyncpa [#allocation5], 0
    loop: start=0, step=1, limit=4
    $region2: #{tpu_custom_call.1} parent=1 // loop_pre_header
      _
    $region3: #{tpu_custom_call.1} parent=1 // loop_header
      %s15 = sphi 0, %s19
      %p16 = scmp.ge.s32.totalorder %s15, 4
      %s22 = sphi 0, %s34
      %s23 = sphi 0, %s30
      %s24 = sphi 0, %s22
      %s25 = sphi 0, %s23
      %s26 = sphi 0, %s24
      %s27 = sphi 0, %s25
      %s45 = sphi 0, %s47
      %s48 = sphi 0, %s45
      %s49 = sphi 0, %s48
      %s65 = sphi 0, %s49
      %s79 = sphi 0, %s81
      %s82 = sphi 0, %s79
      %s83 = sphi 0, %s82
      %s99 = sphi 0, %s83
      %s105 = sphi 0, %s107
      %s108 = sphi 0, %s105
      %s109 = sphi 0, %s108
      %s125 = sphi 0, %s109
    $region4: #{tpu_custom_call.1} parent=1 // loop_header_branch
      %18 = sbr.rel (%p16) target = $region8
    $region5: #{tpu_custom_call.1} parent=1 // loop_body
      %s20 = ssub.s32 %s15, 1
      %s21 = ssub.s32 %s15, 2
      %s28 = sadd.s32 1, %s23
      %p29 = scmp.ge.s32.totalorder %s28, 2
      %s30 = scalar_select %p29, 0, %s28
      %s31 = sadd.s32 1, %s22
      %s32 = scalar_select %p29, %s31, %s22
      %p33 = scmp.ge.s32.totalorder %s32, 1
      %s34 = scalar_select %p33, 0, %s32
      %s35 = smul.u32 %s22, 2
      %s36 = sadd.s32 %s35, %s23
      %p37 = scmp.lt.s32.totalorder %s36, 1
      %s38 = scalar_select %p37, %s36, 1
      %s39 = smul.u32 %s34, 2
      %s40 = sadd.s32 %s39, %s30
      %p41 = scmp.lt.s32.totalorder %s40, 1
      %s42 = scalar_select %p41, %s40, 1
      %s43 = ssub.s32 %s38, %s42
      %p44 = scmp.eq.s32.totalorder %s43, 0
      %s46 = sadd.s32 %s45, 1
      %s47 = scalar_select %p44, %s45, %s46
      %p50 = pneg %p44
      %p51 = scmp.eq.s32.totalorder %s15, 1
      %p52 = por %p50, %p51
      %p53 = scmp.ne.s32.totalorder %s45, %s48
      %p54 = scmp.eq.s32.totalorder %s15, 0
      %p55 = por %p53, %p54
      %p56 = scmp.ne.s32.totalorder %s45, %s48
      %p57 = scmp.eq.s32.totalorder %s20, 1
      %p58 = por %p56, %p57
      %p59 = scmp.ne.s32.totalorder %s48, %s49
      %p60 = scmp.eq.s32.totalorder %s20, 0
      %p61 = por %p59, %p60
      %p62 = scmp.ne.s32.totalorder %s48, %s49
      %p63 = scmp.eq.s32.totalorder %s21, 1
      %p64 = por %p62, %p63
      %p66 = scmp.ne.s32.totalorder %s49, %s65
      %p67 = scmp.eq.s32.totalorder %s21, 0
      %p68 = por %p66, %p67
      %s69 = smul.u32 %s22, 2
      %s70 = sadd.s32 %s69, %s23
      %p71 = scmp.lt.s32.totalorder %s70, 1
      %s72 = scalar_select %p71, %s70, 1
      %s73 = smul.u32 %s34, 2
      %s74 = sadd.s32 %s73, %s30
      %p75 = scmp.lt.s32.totalorder %s74, 1
      %s76 = scalar_select %p75, %s74, 1
      %s77 = ssub.s32 %s72, %s76
      %p78 = scmp.eq.s32.totalorder %s77, 0
      %s80 = sadd.s32 %s79, 1
      %s81 = scalar_select %p78, %s79, %s80
      %p84 = pneg %p78
      %p85 = scmp.eq.s32.totalorder %s15, 1
      %p86 = por %p84, %p85
      %p87 = scmp.ne.s32.totalorder %s79, %s82
      %p88 = scmp.eq.s32.totalorder %s15, 0
      %p89 = por %p87, %p88
      %p90 = scmp.ne.s32.totalorder %s79, %s82
      %p91 = scmp.eq.s32.totalorder %s20, 1
      %p92 = por %p90, %p91
      %p93 = scmp.ne.s32.totalorder %s82, %s83
      %p94 = scmp.eq.s32.totalorder %s20, 0
      %p95 = por %p93, %p94
      %p96 = scmp.ne.s32.totalorder %s82, %s83
      %p97 = scmp.eq.s32.totalorder %s21, 1
      %p98 = por %p96, %p97
      %p100 = scmp.ne.s32.totalorder %s83, %s99
      %p101 = scmp.eq.s32.totalorder %s21, 0
      %p102 = por %p100, %p101
      %s103 = ssub.s32 %s22, %s34
      %p104 = scmp.eq.s32.totalorder %s103, 0
      %s106 = sadd.s32 %s105, 1
      %s107 = scalar_select %p104, %s105, %s106
      %p110 = pneg %p104
      %p111 = scmp.eq.s32.totalorder %s15, 1
      %p112 = por %p110, %p111
      %p113 = scmp.ne.s32.totalorder %s105, %s108
      %p114 = scmp.eq.s32.totalorder %s15, 0
      %p115 = por %p113, %p114
      %p116 = scmp.ne.s32.totalorder %s105, %s108
      %p117 = scmp.eq.s32.totalorder %s20, 1
      %p118 = por %p116, %p117
      %p119 = scmp.ne.s32.totalorder %s108, %s109
      %p120 = scmp.eq.s32.totalorder %s20, 0
      %p121 = por %p119, %p120
      %p122 = scmp.ne.s32.totalorder %s108, %s109
      %p123 = scmp.eq.s32.totalorder %s21, 1
      %p124 = por %p122, %p123
      %p126 = scmp.ne.s32.totalorder %s109, %s125
      %p127 = scmp.eq.s32.totalorder %s21, 0
      %p128 = por %p126, %p127
      %p129 = scmp.le.s32.totalorder 1, %s15
      %p130 = scmp.lt.s32.totalorder %s15, 3
      %p131 = pnand %p129, %p130
      %p132 = pneg %p131
      // Predicated region
      $region9: #{tpu_custom_call.1} parent=5 // pred_check
        _
      $region10: #{tpu_custom_call.1} parent=5 // pred_check_branch
        %134 = sbr.rel (%p131) target = $region12
      $region11: #{tpu_custom_call.1} parent=5 // pred_region
        %s135 = ssub.s32 %s15, 1
      $region12: #{tpu_custom_call.1} parent=5 // pred_fallthru
        _
      %p136 = scmp.lt.s32.totalorder %s15, 2
      // Predicated region
      $region13: #{tpu_custom_call.1} parent=5 // pred_check
        %p137 = pneg %p136
      $region14: #{tpu_custom_call.1} parent=5 // pred_check_branch
        %139 = sbr.rel (%p137) target = $region16
      $region15: #{tpu_custom_call.1} parent=5 // pred_region
        // Predicated region
        $region17: #{tpu_custom_call.1} parent=15 // pred_check
          %p140 = pneg %p55
        $region18: #{tpu_custom_call.1} parent=15 // pred_check_branch
          %142 = sbr.rel (%p140) target = $region20
        $region19: #{tpu_custom_call.1} parent=15 // pred_region
          %s143 = sand.u32 %s45, 1
          %s144 = scalar_lea.sflag [#allocation4], %s143
          %s145 = sand.u32 %s45, 1
          %s146 = smul.addr %s145, 32
          %s147 = scalar_lea.vmem [#allocation3], %s146
          %s148 = smul.u32 %s22, 2
          %s149 = sadd.s32 %s148, %s23
          %p150 = scmp.lt.s32.totalorder %s149, 1
          %s151 = scalar_select %p150, %s149, 1
          %s152 = smul.u32 4, %s151
          %s153 = ssub.s32 6, %s152
          %p154 = scmp.lt.s32.totalorder %s153, 4
          %s155 = scalar_select %p154, %s153, 4
          %s156 = smul.u32 8, %s155
          %s157 = ssub.s32 32, %s156
          %s158 = sshll.u32 %s157, 4
          %159 = vsyncadd %s144, %s158
          %p160 = scmp.ne.s32.totalorder 0, %s156
          %s161 = smul.addr %s152, 8
          %s162 = scalar_lea.hbm %s0, %s161
          %s163 = smul.u32 8, %s155
          %s164 = sshll.u32 %s162, 4
          %s165 = int_to_ptr.hbm [resolvable:$true] %s164
          %s166 = sshll.u32 %s147, 4
          %s167 = int_to_ptr.vmem [resolvable:$true] %s166
          %s168 = sshll.u32 %s163, 4
          %172 = dma.hbm_to_vmem [thread:$0]  (%p160), %s165, %s168, %s167, %s144, 128, 128, 8
        $region20: #{tpu_custom_call.1} parent=15 // pred_fallthru
          _
        // Predicated region
        $region21: #{tpu_custom_call.1} parent=15 // pred_check
          %p173 = pneg %p89
        $region22: #{tpu_custom_call.1} parent=15 // pred_check_branch
          %175 = sbr.rel (%p173) target = $region24
        $region23: #{tpu_custom_call.1} parent=15 // pred_region
          %s176 = sand.u32 %s79, 1
          %s177 = scalar_lea.sflag [#allocation7], %s176
          %s178 = sand.u32 %s79, 1
          %s179 = smul.addr %s178, 32
          %s180 = scalar_lea.vmem [#allocation6], %s179
          %s181 = smul.u32 %s22, 2
          %s182 = sadd.s32 %s181, %s23
          %p183 = scmp.lt.s32.totalorder %s182, 1
          %s184 = scalar_select %p183, %s182, 1
          %s185 = smul.u32 4, %s184
          %s186 = ssub.s32 6, %s185
          %p187 = scmp.lt.s32.totalorder %s186, 4
          %s188 = scalar_select %p187, %s186, 4
          %s189 = smul.u32 8, %s188
          %s190 = ssub.s32 32, %s189
          %s191 = sshll.u32 %s190, 4
          %192 = vsyncadd %s177, %s191
          %p193 = scmp.ne.s32.totalorder 0, %s189
          %s194 = smul.addr %s185, 8
          %s195 = scalar_lea.hbm %s1, %s194
          %s196 = smul.u32 8, %s188
          %s197 = sshll.u32 %s195, 4
          %s198 = int_to_ptr.hbm [resolvable:$true] %s197
          %s199 = sshll.u32 %s180, 4
          %s200 = int_to_ptr.vmem [resolvable:$true] %s199
          %s201 = sshll.u32 %s196, 4
          %205 = dma.hbm_to_vmem [thread:$0]  (%p193), %s198, %s201, %s200, %s177, 128, 128, 8
        $region24: #{tpu_custom_call.1} parent=15 // pred_fallthru
          _
      $region16: #{tpu_custom_call.1} parent=5 // pred_fallthru
        _
      %p206 = scmp.le.s32.totalorder 1, %s15
      %p207 = scmp.lt.s32.totalorder %s15, 3
      %p208 = pnand %p206, %p207
      %p209 = pneg %p208
      // Predicated region
      $region25: #{tpu_custom_call.1} parent=5 // pred_check
        _
      $region26: #{tpu_custom_call.1} parent=5 // pred_check_branch
        %211 = sbr.rel (%p208) target = $region28
      $region27: #{tpu_custom_call.1} parent=5 // pred_region
        %s212 = ssub.s32 %s15, 1
        %s213 = sand.u32 %s48, 1
        %s214 = scalar_lea.sflag [#allocation4], %s213
        %s215 = sand.u32 %s48, 1
        %s216 = smul.addr %s215, 32
        %s217 = scalar_lea.vmem [#allocation3], %s216
        // Predicated region
        $region29: #{tpu_custom_call.1} parent=27 // pred_check
          %p218 = pneg %p61
        $region30: #{tpu_custom_call.1} parent=27 // pred_check_branch
          %220 = sbr.rel (%p218) target = $region32
        $region31: #{tpu_custom_call.1} parent=27 // pred_region
          %222 = dma.done %s214, 512
        $region32: #{tpu_custom_call.1} parent=27 // pred_fallthru
          _
        %s223 = sand.u32 %s82, 1
        %s224 = scalar_lea.sflag [#allocation7], %s223
        %s225 = sand.u32 %s82, 1
        %s226 = smul.addr %s225, 32
        %s227 = scalar_lea.vmem [#allocation6], %s226
        // Predicated region
        $region33: #{tpu_custom_call.1} parent=27 // pred_check
          %p228 = pneg %p95
        $region34: #{tpu_custom_call.1} parent=27 // pred_check_branch
          %230 = sbr.rel (%p228) target = $region36
        $region35: #{tpu_custom_call.1} parent=27 // pred_region
          %232 = dma.done %s224, 512
        $region36: #{tpu_custom_call.1} parent=27 // pred_fallthru
          _
        %s233 = sand.u32 %s48, 1
        %s234 = scalar_lea.sflag [#allocation4], %s233
        %s235 = sand.u32 %s48, 1
        %s236 = smul.addr %s235, 32
        %s237 = scalar_lea.vmem [#allocation3], %s236
        %p238 = pneg %p61
        %p239 = pneg %p58
        %s240 = sand.u32 %s82, 1
        %s241 = scalar_lea.sflag [#allocation7], %s240
        %s242 = sand.u32 %s82, 1
        %s243 = smul.addr %s242, 32
        %s244 = scalar_lea.vmem [#allocation6], %s243
        %p245 = pneg %p95
        %p246 = pneg %p92
        %p247 = pneg %p121
        %p248 = pneg %p118
        %s249 = smul.u32 %s24, 2
        %s250 = sadd.s32 %s249, %s25
        %p251 = scmp.lt.s32.totalorder %s250, 1
        %s252 = scalar_select %p251, %s250, 1
        %s253 = smul.u32 4, %s252
        %s254 = ssub.s32 6, %s253
        %p255 = scmp.lt.s32.totalorder %s254, 4
        %s256 = scalar_select %p255, %s254, 4
        %s257 = smul.u32 8, %s256
        %s258 = smul.u32 %s24, 2
        %s259 = sadd.s32 %s258, %s25
        %p260 = scmp.lt.s32.totalorder %s259, 1
        %s261 = scalar_select %p260, %s259, 1
        %s262 = smul.u32 4, %s261
        %s263 = ssub.s32 6, %s262
        %p264 = scmp.lt.s32.totalorder %s263, 4
        %s265 = scalar_select %p264, %s263, 4
        %s266 = smul.u32 8, %s265
        %p267 = scmp.eq.s32.totalorder %s25, 0
        // Predicated region
        $region37: #{tpu_custom_call.1} parent=27 // pred_check
          %p268 = pneg %p267
        $region38: #{tpu_custom_call.1} parent=27 // pred_check_branch
          %270 = sbr.rel (%p268) target = $region40
        $region39: #{tpu_custom_call.1} parent=27 // pred_region
          %271 = vst [vmem:[#allocation2] sm:$0xff] 0.0
          %272 = vst [vmem:[#allocation2 + $0x8] sm:$0xff] 0.0
          %273 = vst [vmem:[#allocation2 + $0x10] sm:$0xff] 0.0
          %274 = vst [vmem:[#allocation2 + $0x18] sm:$0xff] 0.0
        $region40: #{tpu_custom_call.1} parent=27 // pred_fallthru
          _
        %v275 = vld [vmem:[%s217] sm:$0xff]
        %v276 = vld [vmem:[%s217 + $0x8] sm:$0xff]
        %v277 = vld [vmem:[%s217 + $0x10] sm:$0xff]
        %v278 = vld [vmem:[%s217 + $0x18] sm:$0xff]
        %v279 = vld [vmem:[%s227] sm:$0xff]
        %v280 = vld [vmem:[%s227 + $0x8] sm:$0xff]
        %v281 = vld [vmem:[%s227 + $0x10] sm:$0xff]
        %v282 = vld [vmem:[%s227 + $0x18] sm:$0xff]
        %v283 = vsub.f32 %v275, %v279
        %v284 = vsub.f32 %v276, %v280
        %v285 = vsub.f32 %v277, %v281
        %v286 = vsub.f32 %v278, %v282
        %s287 = smul.u32 %s24, 2
        %s288 = sadd.s32 %s287, %s25
        %s289 = smul.u32 %s288, 32
        %v290 = vlaneseq
        %v291 = vshrl.u32 %v290, 7
        %v292 = vadd.s32 %v291, 8
        %v293 = vadd.s32 %v291, 16
        %v294 = vadd.s32 %v291, 24
        %v295 = vstv %s289
        %v296 = vadd.s32 %v295, %v291
        %v297 = vadd.s32 %v295, %v292
        %v298 = vadd.s32 %v295, %v293
        %v299 = vadd.s32 %v295, %v294
        %vm300 = vcmp.lt.s32.totalorder %v296, 48
        %vm301 = vcmp.lt.s32.totalorder %v297, 48
        %vm302 = vcmp.lt.s32.totalorder %v298, 48
        %vm303 = vcmp.lt.s32.totalorder %v299, 48
        %v304 = vsel %vm300, 1, 0
        %v305 = vsel %vm301, 1, 0
        %v306 = vsel %vm302, 1, 0
        %v307 = vsel %vm303, 1, 0
        %vm308 = vcmp.eq.s32.totalorder %v304, 1
        %vm309 = vcmp.eq.s32.totalorder %v305, 1
        %vm310 = vcmp.eq.s32.totalorder %v306, 1
        %vm311 = vcmp.eq.s32.totalorder %v307, 1
        %v312 = vsel %vm308, %v283, 0.0
        %v313 = vsel %vm309, %v284, 0.0
        %v314 = vsel %vm310, %v285, 0.0
        %v315 = vsel %vm311, %v286, 0.0
        %v316 = vmul.f32 %v312, %v312
        %v317 = vmul.f32 %v313, %v313
        %v318 = vmul.f32 %v314, %v314
        %v319 = vmul.f32 %v315, %v315
        %v320 = vld [vmem:[#allocation2] sm:$0xff]
        %v321 = vld [vmem:[#allocation2 + $0x8] sm:$0xff]
        %v322 = vld [vmem:[#allocation2 + $0x10] sm:$0xff]
        %v323 = vld [vmem:[#allocation2 + $0x18] sm:$0xff]
        %v324 = vadd.f32 %v316, 0.0
        %v325 = vadd.f32 %v317, 0.0
        %v326 = vadd.f32 %v318, 0.0
        %v327 = vadd.f32 %v319, 0.0
        %v328 = vadd.f32 %v320, %v324
        %v329 = vadd.f32 %v321, %v325
        %v330 = vadd.f32 %v322, %v326
        %v331 = vadd.f32 %v323, %v327
        %332 = vst [vmem:[#allocation2] sm:$0xff] %v328
        %333 = vst [vmem:[#allocation2 + $0x8] sm:$0xff] %v329
        %334 = vst [vmem:[#allocation2 + $0x10] sm:$0xff] %v330
        %335 = vst [vmem:[#allocation2 + $0x18] sm:$0xff] %v331
        %p336 = scmp.eq.s32.totalorder %s25, 1
        // Predicated region
        $region41: #{tpu_custom_call.1} parent=27 // pred_check
          %p337 = pneg %p336
        $region42: #{tpu_custom_call.1} parent=27 // pred_check_branch
          %339 = sbr.rel (%p337) target = $region44
        $region43: #{tpu_custom_call.1} parent=27 // pred_region
          %v340 = vld [vmem:[#allocation2] sm:$0xff]
          %v341 = vld [vmem:[#allocation2 + $0x8] sm:$0xff]
          %v342 = vld [vmem:[#allocation2 + $0x10] sm:$0xff]
          %v343 = vld [vmem:[#allocation2 + $0x18] sm:$0xff]
          %344 = vst [vmem:[#allocation8] sm:$0xff] %v340
          %345 = vst [vmem:[#allocation8 + $0x8] sm:$0xff] %v341
          %346 = vst [vmem:[#allocation8 + $0x10] sm:$0xff] %v342
          %347 = vst [vmem:[#allocation8 + $0x18] sm:$0xff] %v343
        $region44: #{tpu_custom_call.1} parent=27 // pred_fallthru
          _
        // Predicated region
        $region45: #{tpu_custom_call.1} parent=27 // pred_check
          %p348 = pneg %p118
        $region46: #{tpu_custom_call.1} parent=27 // pred_check_branch
          %350 = sbr.rel (%p348) target = $region48
        $region47: #{tpu_custom_call.1} parent=27 // pred_region
          %352 = vsyncadd [#allocation5], 0
          %s353 = smul.addr %s24, 4
          %s354 = smul.addr %s353, 8
          %s355 = scalar_lea.hbm %s2, %s354
          %s356 = sshll.u32 [#allocation8], 4
          %s357 = int_to_ptr.vmem [resolvable:$true] %s356
          %s358 = sshll.u32 %s355, 4
          %s359 = int_to_ptr.hbm [resolvable:$true] %s358
          %364 = dma.vmem_to_hbm [thread:$0]  %s357, 512, %s359, [#allocation5], 128, 128, 8
        $region48: #{tpu_custom_call.1} parent=27 // pred_fallthru
          _
        // Predicated region
        $region49: #{tpu_custom_call.1} parent=27 // pred_check
          %p365 = pneg %p118
        $region50: #{tpu_custom_call.1} parent=27 // pred_check_branch
          %367 = sbr.rel (%p365) target = $region52
        $region51: #{tpu_custom_call.1} parent=27 // pred_region
          %369 = dma.done [#allocation5], 512
        $region52: #{tpu_custom_call.1} parent=27 // pred_fallthru
          _
      $region28: #{tpu_custom_call.1} parent=5 // pred_fallthru
        _
      %p370 = scmp.le.s32.totalorder 2, %s15
      // Predicated region
      $region53: #{tpu_custom_call.1} parent=5 // pred_check
        %p371 = pneg %p370
      $region54: #{tpu_custom_call.1} parent=5 // pred_check_branch
        %373 = sbr.rel (%p371) target = $region56
      $region55: #{tpu_custom_call.1} parent=5 // pred_region
        %s374 = ssub.s32 %s15, 2
      $region56: #{tpu_custom_call.1} parent=5 // pred_fallthru
        _
    $region6: #{tpu_custom_call.1} parent=1 // loop_footer
      %s19 = sadd.s32 1, %s15
    $region7: #{tpu_custom_call.1} parent=1 // loop_footer_branch
      %14 = sbr.rel target = $region3
    $region8: #{tpu_custom_call.1} parent=1 // loop_exit
      _
    %375 = vsyncpa [#allocation4], 1
    %s376 = scalar_lea.sflag [#allocation4], 1
    %377 = vsyncpa %s376, 1
    %378 = vsyncpa [#allocation7], 1
    %s379 = scalar_lea.sflag [#allocation7], 1
    %380 = vsyncpa %s379, 1
    %381 = vsyncpa [#allocation5], 1
    %s382 = scalar_lea.sflag [#allocation5], 1
    %383 = vsyncpa %s382, 1

</llo_original>
